<compile_context>
chip_gen: v6e
topology: v6e:2x2x1
jax: 0.10.0
libtpu: 0.0.40
codegen_flags: <defaults>
</compile_context>

<pallas_src>
import functools

import jax
import jax.numpy as jnp
from jax.experimental import pallas as pl
from jax.experimental.pallas import tpu as pltpu


def _round_up(a, b):
    return (a + b - 1) // b * b


def _hybrid_embed_kernel(x_ref, w1_ref, b1_ref, w2_ref, b2_ref, o_ref, *, rt_rows, p, fr):
    """One grid step = `rt_rows` token-rows of the image (each row = Gw tokens).

    x_ref : (RT, p*fr, Gw, p*fr*C)  f32   contiguous NHWC row-slabs (cast to bf16 in-kernel)
    w1_ref: (fr, p*fr*C, PFD)       bf16  backbone conv kernel-row kh slices, block-diag over pw
    b1_ref: (1, PFD)                f32   backbone bias tiled over pw (zero padded)
    w2_ref: (p, PFD, E_pad)         bf16  proj conv kernel-row ph slices, (pw, fd) merged in K
    b2_ref: (1, E_pad)              f32
    o_ref : (RT, Gw, E_pad)         bf16
    """
    gw = o_ref.shape[1]
    e_pad = o_ref.shape[2]
    pfd = w1_ref.shape[2]

    # Hoisted bias reads (feedback: don't re-broadcast inside the unrolled loops).
    b1 = b1_ref[...]          # (1, PFD)
    b2 = b2_ref[...]          # (1, E_pad)

    for rt in range(rt_rows):                       # token-rows in this tile (small, unrolled)
        acc2 = jnp.zeros((gw, e_pad), jnp.float32)  # tiny accumulator -> no vreg spilling
        for ph in range(p):                         # image-row groups of this token row
            acc1 = jnp.zeros((gw, pfd), jnp.float32)
            for kh in range(fr):                    # backbone conv kernel rows
                # One image row, already shaped (Gw tokens, p*fr*C columns): a pure
                # leading-dim indexed load, no gather / transpose needed.
                lhs = x_ref[rt, ph * fr + kh].astype(jnp.bfloat16)      # (Gw, p*fr*C)
                acc1 += jnp.dot(lhs, w1_ref[kh],
                                preferred_element_type=jnp.float32)     # (Gw, PFD)
            feat = jnp.maximum(acc1 + b1, 0.0).astype(jnp.bfloat16)     # backbone ReLU
            acc2 += jnp.dot(feat, w2_ref[ph],
                            preferred_element_type=jnp.float32)         # (Gw, E_pad)
        o_ref[rt] = (acc2 + b2).astype(o_ref.dtype)


def hybrid_embed_fused(x_nchw, bb_w, bb_b, proj_w, proj_b, *,
                       min_grid_steps=4, tile_budget_bytes=4 << 20):
    """Fused HybridEmbed forward: NCHW input -> (B, num_patches, embed_dim) in bf16."""
    B, C, H, W = x_nchw.shape
    FD, Cw, fr, fr2 = bb_w.shape
    E, FDw, p, p2 = proj_w.shape
    assert C == Cw and fr == fr2 and p == p2 and FD == FDw
    assert H % fr == 0 and W % fr == 0
    Fh, Fw = H // fr, W // fr
    assert Fh % p == 0 and Fw % p == 0
    Gh, Gw = Fh // p, Fw // p

    pfrC = p * fr * C                       # K of the first matmul (one image row per token)
    PFD = _round_up(p * FD, 128)            # merged (pw, fd) width, padded once
    E_pad = _round_up(E, 128)               # lane-dense output (real embed dims: no-op)
    n_rows = B * Gh                         # token rows; one row = Gw tokens

    # ---- glue: single NCHW->NHWC transpose (free if activations are already NHWC),
    # everything else is a pure reshape: (B*Gh, p*fr, Gw, p*fr*C) row-slab view.
    x_rows = jnp.transpose(x_nchw, (0, 2, 3, 1)).reshape(n_rows, p * fr, Gw, pfrC)

    # ---- weights (tiny; host-side prep).
    # Backbone conv split per kernel row kh, columns flattened (kw, c); block-diagonal
    # over the pw token positions so all pw's of a token are produced by one matmul.
    base = bb_w.transpose(2, 3, 1, 0).reshape(fr, fr * C, FD)             # (kh, kw*C, FD)
    eye_p = jnp.eye(p, dtype=base.dtype)
    w1 = jnp.einsum('kaf,ij->kiajf', base, eye_p).reshape(fr, pfrC, p * FD)
    w1 = jnp.pad(w1, ((0, 0), (0, 0), (0, PFD - p * FD))).astype(jnp.bfloat16)
    b1 = jnp.pad(jnp.tile(bb_b, p), (0, PFD - p * FD)).reshape(1, PFD).astype(jnp.float32)
    # Proj conv split per kernel row ph, contracting over the merged (pw, fd) minor dim.
    w2 = proj_w.transpose(2, 3, 1, 0).reshape(p, p * FD, E)               # (ph, pw*FD, E)
    w2 = jnp.pad(w2, ((0, 0), (0, PFD - p * FD), (0, E_pad - E))).astype(jnp.bfloat16)
    b2 = jnp.pad(proj_b, (0, E_pad - E)).reshape(1, E_pad).astype(jnp.float32)

    # ---- row-tile size: largest divisor of n_rows that fits the per-buffer VMEM budget
    # and still leaves >= min_grid_steps grid steps (pipelining + v7x 2-TC sharding).
    row_bytes = p * fr * Gw * pfrC * 4
    cap = max(1, min(tile_budget_bytes // max(row_bytes, 1),
                     n_rows // min_grid_steps if n_rows >= min_grid_steps else 1,
                     n_rows))
    rt_rows = 1
    for d in range(1, cap + 1):
        if n_rows % d == 0:
            rt_rows = d
    grid = (n_rows // rt_rows,)

    # ---- explicit VMEM budget with headroom (double-buffered tiles + resident weights).
    in_tile = rt_rows * row_bytes
    out_tile = rt_rows * Gw * E_pad * 2
    w_bytes = (w1.size + w2.size) * 2 + (b1.size + b2.size) * 4
    vmem_limit = int(min(64 * 1024 * 1024,
                         max(16 * 1024 * 1024, 4 * (in_tile + out_tile + w_bytes))))

    n_tok = B * Gh * Gw
    cost = pl.CostEstimate(
        flops=int(2 * n_tok * (p * fr * pfrC * PFD + p * PFD * E_pad)),
        transcendentals=0,
        bytes_accessed=int(B * H * W * C * 4 + (w1.size + w2.size) * 2
                           + (b1.size + b2.size) * 4 + n_tok * E_pad * 2),
    )

    out = pl.pallas_call(
        functools.partial(_hybrid_embed_kernel, rt_rows=rt_rows, p=p, fr=fr),
        out_shape=jax.ShapeDtypeStruct((n_rows, Gw, E_pad), jnp.bfloat16),
        grid=grid,
        in_specs=[
            # input: contiguous HBM slab per grid step, tiled only on the token-row axis.
            pl.BlockSpec((rt_rows, p * fr, Gw, pfrC), lambda i: (i, 0, 0, 0)),
            # weights / biases: constant index_map -> stay resident in VMEM across steps.
            # TODO(synk): mark these pipeline_mode=pl.Buffered(1) when single-buffered
            # constant operands matter (after the PFD restructure w2 is only KBs..MBs).
            pl.BlockSpec((fr, pfrC, PFD), lambda i: (0, 0, 0)),
            pl.BlockSpec((1, PFD), lambda i: (0, 0)),
            pl.BlockSpec((p, PFD, E_pad), lambda i: (0, 0, 0)),
            pl.BlockSpec((1, E_pad), lambda i: (0, 0)),
        ],
        out_specs=pl.BlockSpec((rt_rows, Gw, E_pad), lambda i: (i, 0, 0)),
        compiler_params=pltpu.CompilerParams(
            dimension_semantics=("parallel",),
            vmem_limit_bytes=vmem_limit),
        cost_estimate=cost,
    )(x_rows, w1, b1, w2, b2)

    # Rows are already in (b, gh, gw) order == flatten(2).transpose(1, 2); pure reshape.
    out = out.reshape(B, Gh * Gw, E_pad)
    if E_pad != E:
        out = out[..., :E]        # only copies when embed_dim isn't already lane-aligned
    return out


class HybridEmbedPallas:
    """CNN feature-map embedding: backbone conv+ReLU -> proj conv -> (B, N, E).

    Synthetic backbone = Conv2d(in_chans, feature_dim, k=stride=feature_ratio) + ReLU.
    proj = Conv2d(feature_dim, embed_dim, kernel_size=patch_size, stride=patch_size).
    """

    def __init__(self, key, img_size=16, patch_size=2, in_chans=4,
                 feature_dim=8, feature_ratio=4, embed_dim=32):
        self.img_size = (img_size, img_size)
        self.patch_size = (patch_size, patch_size)
        self.feature_ratio = (feature_ratio, feature_ratio)
        self.feature_size = (img_size // feature_ratio, img_size // feature_ratio)
        assert self.feature_size[0] % patch_size == 0
        self.grid_size = (self.feature_size[0] // patch_size,
                          self.feature_size[1] // patch_size)
        self.num_patches = self.grid_size[0] * self.grid_size[1]

        k0, k1, k2, k3 = jax.random.split(key, 4)
        self.bb_w = 0.05 * jax.random.normal(
            k0, (feature_dim, in_chans, feature_ratio, feature_ratio), jnp.float32)
        self.bb_b = 0.01 * jax.random.normal(k1, (feature_dim,), jnp.float32)
        self.proj_w = 0.05 * jax.random.normal(
            k2, (embed_dim, feature_dim, patch_size, patch_size), jnp.float32)
        self.proj_b = 0.01 * jax.random.normal(k3, (embed_dim,), jnp.float32)

        self._forward = jax.jit(hybrid_embed_fused)

    def forward(self, x):
        return self._forward(x, self.bb_w, self.bb_b, self.proj_w, self.proj_b)


def _reference_forward(module, x):
    """Pure-JAX reference (lax.conv, f32 math) with bf16 rounding matched to the kernel."""
    f32 = jnp.float32
    xb = x.astype(jnp.bfloat16).astype(f32)
    w1 = module.bb_w.astype(jnp.bfloat16).astype(f32)
    w2 = module.proj_w.astype(jnp.bfloat16).astype(f32)

    dn = jax.lax.conv_dimension_numbers(x.shape, w1.shape, ("NCHW", "OIHW", "NCHW"))
    feat = jax.lax.conv_general_dilated(
        xb, w1, window_strides=module.feature_ratio, padding="VALID",
        dimension_numbers=dn, precision=jax.lax.Precision.HIGHEST)
    feat = feat + module.bb_b.reshape(1, -1, 1, 1)
    feat = jnp.maximum(feat, 0.0)
    feat = feat.astype(jnp.bfloat16).astype(f32)   # kernel casts feat to bf16 before proj

    dn2 = jax.lax.conv_dimension_numbers(feat.shape, w2.shape, ("NCHW", "OIHW", "NCHW"))
    y = jax.lax.conv_general_dilated(
        feat, w2, window_strides=module.patch_size, padding="VALID",
        dimension_numbers=dn2, precision=jax.lax.Precision.HIGHEST)
    y = y + module.proj_b.reshape(1, -1, 1, 1)
    B, E, Gh, Gw = y.shape
    return y.reshape(B, E, Gh * Gw).transpose(0, 2, 1)


if __name__ == "__main__":
    key = jax.random.PRNGKey(0)
    k_param, k_x = jax.random.split(key)

    B, C, H, W = 2, 4, 16, 16
    embed_dim = 32
    module = HybridEmbedPallas(k_param, img_size=H, patch_size=2, in_chans=C,
                               feature_dim=8, feature_ratio=4, embed_dim=embed_dim)

    x = jax.random.normal(k_x, (B, C, H, W), jnp.float32)

    out = jax.block_until_ready(module.forward(x))
    assert out.shape == (B, module.num_patches, embed_dim), out.shape

    ref = jax.block_until_ready(_reference_forward(module, x))
    out_f32 = out.astype(jnp.float32)
    max_err = float(jnp.max(jnp.abs(out_f32 - ref)))
    assert jnp.allclose(out_f32, ref, atol=1e-2, rtol=1e-2), f"mismatch vs reference (max err {max_err})"

    print("KERNEL_OK")
</pallas_src>

<mosaic_0001>
module attributes {stable_mosaic.version = 11 : i64} {
  func.func @_hybrid_embed_kernel(%arg0: i32, %arg1: memref<1x8x2x32xf32, #tpu.memory_space<vmem>>, %arg2: memref<4x32x128xbf16, #tpu.memory_space<vmem>>, %arg3: memref<1x128xf32, #tpu.memory_space<vmem>>, %arg4: memref<2x128x128xbf16, #tpu.memory_space<vmem>>, %arg5: memref<1x128xf32, #tpu.memory_space<vmem>>, %arg6: memref<1x2x128xbf16, #tpu.memory_space<vmem>>) attributes {dimension_semantics = [#tpu.dimension_semantics<parallel>], iteration_bounds = array<i64: 4>, scalar_prefetch = 0 : i64, scratch_operands = 0 : i64, tpu.core_type = #tpu.core_type<tc>, window_params = [{transform_indices = @transform_0, window_bounds = array<i64: 1, 8, 2, 32>}, {pipeline_mode = #tpu.pipeline_mode<synchronous>, transform_indices = @transform_1, window_bounds = array<i64: 4, 32, 128>}, {pipeline_mode = #tpu.pipeline_mode<synchronous>, transform_indices = @transform_2, window_bounds = array<i64: 1, 128>}, {pipeline_mode = #tpu.pipeline_mode<synchronous>, transform_indices = @transform_3, window_bounds = array<i64: 2, 128, 128>}, {pipeline_mode = #tpu.pipeline_mode<synchronous>, transform_indices = @transform_4, window_bounds = array<i64: 1, 128>}, {transform_indices = @transform_5, window_bounds = array<i64: 1, 2, 128>}]} {
    %c0 = arith.constant 0 : index
    %c0_0 = arith.constant 0 : index
    %0 = vector.load %arg3[%c0, %c0_0] : memref<1x128xf32, #tpu.memory_space<vmem>>, vector<1x128xf32>
    %c0_1 = arith.constant 0 : index
    %c0_2 = arith.constant 0 : index
    %1 = vector.load %arg5[%c0_1, %c0_2] : memref<1x128xf32, #tpu.memory_space<vmem>>, vector<1x128xf32>
    %cst = arith.constant 0.000000e+00 : f32
    %2 = vector.broadcast %cst : f32 to vector<2x128xf32>
    %cst_3 = arith.constant 0.000000e+00 : f32
    %3 = vector.broadcast %cst_3 : f32 to vector<2x128xf32>
    %c0_4 = arith.constant 0 : index
    %c0_5 = arith.constant 0 : index
    %c0_6 = arith.constant 0 : index
    %c0_7 = arith.constant 0 : index
    %4 = vector.load %arg1[%c0_4, %c0_5, %c0_6, %c0_7] : memref<1x8x2x32xf32, #tpu.memory_space<vmem>>, vector<1x1x2x32xf32>
    %5 = vector.shape_cast %4 : vector<1x1x2x32xf32> to vector<2x32xf32>
    %6 = arith.truncf %5 : vector<2x32xf32> to vector<2x32xbf16>
    %c0_8 = arith.constant 0 : index
    %c0_9 = arith.constant 0 : index
    %c0_10 = arith.constant 0 : index
    %7 = vector.load %arg2[%c0_8, %c0_9, %c0_10] : memref<4x32x128xbf16, #tpu.memory_space<vmem>>, vector<1x32x128xbf16>
    %8 = vector.shape_cast %7 : vector<1x32x128xbf16> to vector<32x128xbf16>
    %cst_11 = arith.constant dense<0.000000e+00> : vector<2x128xf32>
    %9 = tpu.matmul %6, %8, %cst_11 {dimension_numbers = #tpu.dot_dimension_numbers<[1], [0], [0], [1], [0, 0, 1, 1], [], []>} : vector<2x32xbf16>, vector<32x128xbf16>, vector<2x128xf32> -> vector<2x128xf32>
    %10 = arith.addf %3, %9 : vector<2x128xf32>
    %c0_12 = arith.constant 0 : index
    %c1 = arith.constant 1 : index
    %c0_13 = arith.constant 0 : index
    %c0_14 = arith.constant 0 : index
    %11 = vector.load %arg1[%c0_12, %c1, %c0_13, %c0_14] : memref<1x8x2x32xf32, #tpu.memory_space<vmem>>, vector<1x1x2x32xf32>
    %12 = vector.shape_cast %11 : vector<1x1x2x32xf32> to vector<2x32xf32>
    %13 = arith.truncf %12 : vector<2x32xf32> to vector<2x32xbf16>
    %c1_15 = arith.constant 1 : index
    %c0_16 = arith.constant 0 : index
    %c0_17 = arith.constant 0 : index
    %14 = vector.load %arg2[%c1_15, %c0_16, %c0_17] : memref<4x32x128xbf16, #tpu.memory_space<vmem>>, vector<1x32x128xbf16>
    %15 = vector.shape_cast %14 : vector<1x32x128xbf16> to vector<32x128xbf16>
    %cst_18 = arith.constant dense<0.000000e+00> : vector<2x128xf32>
    %16 = tpu.matmul %13, %15, %cst_18 {dimension_numbers = #tpu.dot_dimension_numbers<[1], [0], [0], [1], [0, 0, 1, 1], [], []>} : vector<2x32xbf16>, vector<32x128xbf16>, vector<2x128xf32> -> vector<2x128xf32>
    %17 = arith.addf %10, %16 : vector<2x128xf32>
    %c0_19 = arith.constant 0 : index
    %c2 = arith.constant 2 : index
    %c0_20 = arith.constant 0 : index
    %c0_21 = arith.constant 0 : index
    %18 = vector.load %arg1[%c0_19, %c2, %c0_20, %c0_21] : memref<1x8x2x32xf32, #tpu.memory_space<vmem>>, vector<1x1x2x32xf32>
    %19 = vector.shape_cast %18 : vector<1x1x2x32xf32> to vector<2x32xf32>
    %20 = arith.truncf %19 : vector<2x32xf32> to vector<2x32xbf16>
    %c2_22 = arith.constant 2 : index
    %c0_23 = arith.constant 0 : index
    %c0_24 = arith.constant 0 : index
    %21 = vector.load %arg2[%c2_22, %c0_23, %c0_24] : memref<4x32x128xbf16, #tpu.memory_space<vmem>>, vector<1x32x128xbf16>
    %22 = vector.shape_cast %21 : vector<1x32x128xbf16> to vector<32x128xbf16>
    %cst_25 = arith.constant dense<0.000000e+00> : vector<2x128xf32>
    %23 = tpu.matmul %20, %22, %cst_25 {dimension_numbers = #tpu.dot_dimension_numbers<[1], [0], [0], [1], [0, 0, 1, 1], [], []>} : vector<2x32xbf16>, vector<32x128xbf16>, vector<2x128xf32> -> vector<2x128xf32>
    %24 = arith.addf %17, %23 : vector<2x128xf32>
    %c0_26 = arith.constant 0 : index
    %c3 = arith.constant 3 : index
    %c0_27 = arith.constant 0 : index
    %c0_28 = arith.constant 0 : index
    %25 = vector.load %arg1[%c0_26, %c3, %c0_27, %c0_28] : memref<1x8x2x32xf32, #tpu.memory_space<vmem>>, vector<1x1x2x32xf32>
    %26 = vector.shape_cast %25 : vector<1x1x2x32xf32> to vector<2x32xf32>
    %27 = arith.truncf %26 : vector<2x32xf32> to vector<2x32xbf16>
    %c3_29 = arith.constant 3 : index
    %c0_30 = arith.constant 0 : index
    %c0_31 = arith.constant 0 : index
    %28 = vector.load %arg2[%c3_29, %c0_30, %c0_31] : memref<4x32x128xbf16, #tpu.memory_space<vmem>>, vector<1x32x128xbf16>
    %29 = vector.shape_cast %28 : vector<1x32x128xbf16> to vector<32x128xbf16>
    %cst_32 = arith.constant dense<0.000000e+00> : vector<2x128xf32>
    %30 = tpu.matmul %27, %29, %cst_32 {dimension_numbers = #tpu.dot_dimension_numbers<[1], [0], [0], [1], [0, 0, 1, 1], [], []>} : vector<2x32xbf16>, vector<32x128xbf16>, vector<2x128xf32> -> vector<2x128xf32>
    %31 = arith.addf %24, %30 : vector<2x128xf32>
    %32 = vector.broadcast %0 : vector<1x128xf32> to vector<2x128xf32>
    %33 = arith.addf %31, %32 : vector<2x128xf32>
    %cst_33 = arith.constant 0.000000e+00 : f32
    %34 = vector.broadcast %cst_33 : f32 to vector<2x128xf32>
    %35 = arith.maximumf %33, %34 : vector<2x128xf32>
    %36 = arith.truncf %35 : vector<2x128xf32> to vector<2x128xbf16>
    %c0_34 = arith.constant 0 : index
    %c0_35 = arith.constant 0 : index
    %c0_36 = arith.constant 0 : index
    %37 = vector.load %arg4[%c0_34, %c0_35, %c0_36] : memref<2x128x128xbf16, #tpu.memory_space<vmem>>, vector<1x128x128xbf16>
    %38 = vector.shape_cast %37 : vector<1x128x128xbf16> to vector<128x128xbf16>
    %cst_37 = arith.constant dense<0.000000e+00> : vector<2x128xf32>
    %39 = tpu.matmul %36, %38, %cst_37 {dimension_numbers = #tpu.dot_dimension_numbers<[1], [0], [0], [1], [0, 0, 1, 1], [], []>} : vector<2x128xbf16>, vector<128x128xbf16>, vector<2x128xf32> -> vector<2x128xf32>
    %40 = arith.addf %2, %39 : vector<2x128xf32>
    %cst_38 = arith.constant 0.000000e+00 : f32
    %41 = vector.broadcast %cst_38 : f32 to vector<2x128xf32>
    %c0_39 = arith.constant 0 : index
    %c4 = arith.constant 4 : index
    %c0_40 = arith.constant 0 : index
    %c0_41 = arith.constant 0 : index
    %42 = vector.load %arg1[%c0_39, %c4, %c0_40, %c0_41] : memref<1x8x2x32xf32, #tpu.memory_space<vmem>>, vector<1x1x2x32xf32>
    %43 = vector.shape_cast %42 : vector<1x1x2x32xf32> to vector<2x32xf32>
    %44 = arith.truncf %43 : vector<2x32xf32> to vector<2x32xbf16>
    %c0_42 = arith.constant 0 : index
    %c0_43 = arith.constant 0 : index
    %c0_44 = arith.constant 0 : index
    %45 = vector.load %arg2[%c0_42, %c0_43, %c0_44] : memref<4x32x128xbf16, #tpu.memory_space<vmem>>, vector<1x32x128xbf16>
    %46 = vector.shape_cast %45 : vector<1x32x128xbf16> to vector<32x128xbf16>
    %cst_45 = arith.constant dense<0.000000e+00> : vector<2x128xf32>
    %47 = tpu.matmul %44, %46, %cst_45 {dimension_numbers = #tpu.dot_dimension_numbers<[1], [0], [0], [1], [0, 0, 1, 1], [], []>} : vector<2x32xbf16>, vector<32x128xbf16>, vector<2x128xf32> -> vector<2x128xf32>
    %48 = arith.addf %41, %47 : vector<2x128xf32>
    %c0_46 = arith.constant 0 : index
    %c5 = arith.constant 5 : index
    %c0_47 = arith.constant 0 : index
    %c0_48 = arith.constant 0 : index
    %49 = vector.load %arg1[%c0_46, %c5, %c0_47, %c0_48] : memref<1x8x2x32xf32, #tpu.memory_space<vmem>>, vector<1x1x2x32xf32>
    %50 = vector.shape_cast %49 : vector<1x1x2x32xf32> to vector<2x32xf32>
    %51 = arith.truncf %50 : vector<2x32xf32> to vector<2x32xbf16>
    %c1_49 = arith.constant 1 : index
    %c0_50 = arith.constant 0 : index
    %c0_51 = arith.constant 0 : index
    %52 = vector.load %arg2[%c1_49, %c0_50, %c0_51] : memref<4x32x128xbf16, #tpu.memory_space<vmem>>, vector<1x32x128xbf16>
    %53 = vector.shape_cast %52 : vector<1x32x128xbf16> to vector<32x128xbf16>
    %cst_52 = arith.constant dense<0.000000e+00> : vector<2x128xf32>
    %54 = tpu.matmul %51, %53, %cst_52 {dimension_numbers = #tpu.dot_dimension_numbers<[1], [0], [0], [1], [0, 0, 1, 1], [], []>} : vector<2x32xbf16>, vector<32x128xbf16>, vector<2x128xf32> -> vector<2x128xf32>
    %55 = arith.addf %48, %54 : vector<2x128xf32>
    %c0_53 = arith.constant 0 : index
    %c6 = arith.constant 6 : index
    %c0_54 = arith.constant 0 : index
    %c0_55 = arith.constant 0 : index
    %56 = vector.load %arg1[%c0_53, %c6, %c0_54, %c0_55] : memref<1x8x2x32xf32, #tpu.memory_space<vmem>>, vector<1x1x2x32xf32>
    %57 = vector.shape_cast %56 : vector<1x1x2x32xf32> to vector<2x32xf32>
    %58 = arith.truncf %57 : vector<2x32xf32> to vector<2x32xbf16>
    %c2_56 = arith.constant 2 : index
    %c0_57 = arith.constant 0 : index
    %c0_58 = arith.constant 0 : index
    %59 = vector.load %arg2[%c2_56, %c0_57, %c0_58] : memref<4x32x128xbf16, #tpu.memory_space<vmem>>, vector<1x32x128xbf16>
    %60 = vector.shape_cast %59 : vector<1x32x128xbf16> to vector<32x128xbf16>
    %cst_59 = arith.constant dense<0.000000e+00> : vector<2x128xf32>
    %61 = tpu.matmul %58, %60, %cst_59 {dimension_numbers = #tpu.dot_dimension_numbers<[1], [0], [0], [1], [0, 0, 1, 1], [], []>} : vector<2x32xbf16>, vector<32x128xbf16>, vector<2x128xf32> -> vector<2x128xf32>
    %62 = arith.addf %55, %61 : vector<2x128xf32>
    %c0_60 = arith.constant 0 : index
    %c7 = arith.constant 7 : index
    %c0_61 = arith.constant 0 : index
    %c0_62 = arith.constant 0 : index
    %63 = vector.load %arg1[%c0_60, %c7, %c0_61, %c0_62] : memref<1x8x2x32xf32, #tpu.memory_space<vmem>>, vector<1x1x2x32xf32>
    %64 = vector.shape_cast %63 : vector<1x1x2x32xf32> to vector<2x32xf32>
    %65 = arith.truncf %64 : vector<2x32xf32> to vector<2x32xbf16>
    %c3_63 = arith.constant 3 : index
    %c0_64 = arith.constant 0 : index
    %c0_65 = arith.constant 0 : index
    %66 = vector.load %arg2[%c3_63, %c0_64, %c0_65] : memref<4x32x128xbf16, #tpu.memory_space<vmem>>, vector<1x32x128xbf16>
    %67 = vector.shape_cast %66 : vector<1x32x128xbf16> to vector<32x128xbf16>
    %cst_66 = arith.constant dense<0.000000e+00> : vector<2x128xf32>
    %68 = tpu.matmul %65, %67, %cst_66 {dimension_numbers = #tpu.dot_dimension_numbers<[1], [0], [0], [1], [0, 0, 1, 1], [], []>} : vector<2x32xbf16>, vector<32x128xbf16>, vector<2x128xf32> -> vector<2x128xf32>
    %69 = arith.addf %62, %68 : vector<2x128xf32>
    %70 = vector.broadcast %0 : vector<1x128xf32> to vector<2x128xf32>
    %71 = arith.addf %69, %70 : vector<2x128xf32>
    %cst_67 = arith.constant 0.000000e+00 : f32
    %72 = vector.broadcast %cst_67 : f32 to vector<2x128xf32>
    %73 = arith.maximumf %71, %72 : vector<2x128xf32>
    %74 = arith.truncf %73 : vector<2x128xf32> to vector<2x128xbf16>
    %c1_68 = arith.constant 1 : index
    %c0_69 = arith.constant 0 : index
    %c0_70 = arith.constant 0 : index
    %75 = vector.load %arg4[%c1_68, %c0_69, %c0_70] : memref<2x128x128xbf16, #tpu.memory_space<vmem>>, vector<1x128x128xbf16>
    %76 = vector.shape_cast %75 : vector<1x128x128xbf16> to vector<128x128xbf16>
    %cst_71 = arith.constant dense<0.000000e+00> : vector<2x128xf32>
    %77 = tpu.matmul %74, %76, %cst_71 {dimension_numbers = #tpu.dot_dimension_numbers<[1], [0], [0], [1], [0, 0, 1, 1], [], []>} : vector<2x128xbf16>, vector<128x128xbf16>, vector<2x128xf32> -> vector<2x128xf32>
    %78 = arith.addf %40, %77 : vector<2x128xf32>
    %79 = vector.broadcast %1 : vector<1x128xf32> to vector<2x128xf32>
    %80 = arith.addf %78, %79 : vector<2x128xf32>
    %81 = arith.truncf %80 : vector<2x128xf32> to vector<2x128xbf16>
    %c0_72 = arith.constant 0 : index
    %c0_73 = arith.constant 0 : index
    %c0_74 = arith.constant 0 : index
    %82 = vector.load %arg6[%c0_72, %c0_73, %c0_74] : memref<1x2x128xbf16, #tpu.memory_space<vmem>>, vector<1x2x128xbf16>
    %83 = vector.shape_cast %82 : vector<1x2x128xbf16> to vector<2x128xbf16>
    %84 = vector.shape_cast %81 : vector<2x128xbf16> to vector<1x2x128xbf16>
    tpu.vector_store %arg6[%c0_72, %c0_73, %c0_74], %84 {strides = array<i32>} : memref<1x2x128xbf16, #tpu.memory_space<vmem>>, vector<1x2x128xbf16>,
    return
  }
  func.func @transform_0(%arg0: i32) -> (i32, i32, i32, i32) {
    %c0_i32 = arith.constant 0 : i32
    %c0_i32_0 = arith.constant 0 : i32
    %c0_i32_1 = arith.constant 0 : i32
    %c0_i32_2 = arith.constant 0 : i32
    return %arg0, %c0_i32, %c0_i32_0, %c0_i32_1 : i32, i32, i32, i32
  }
  func.func @transform_1(%arg0: i32) -> (i32, i32, i32) {
    %c0_i32 = arith.constant 0 : i32
    %c0_i32_0 = arith.constant 0 : i32
    %c0_i32_1 = arith.constant 0 : i32
    %c0_i32_2 = arith.constant 0 : i32
    return %c0_i32, %c0_i32_0, %c0_i32_1 : i32, i32, i32
  }
  func.func @transform_2(%arg0: i32) -> (i32, i32) {
    %c0_i32 = arith.constant 0 : i32
    %c0_i32_0 = arith.constant 0 : i32
    %c0_i32_1 = arith.constant 0 : i32
    return %c0_i32, %c0_i32_0 : i32, i32
  }
  func.func @transform_3(%arg0: i32) -> (i32, i32, i32) {
    %c0_i32 = arith.constant 0 : i32
    %c0_i32_0 = arith.constant 0 : i32
    %c0_i32_1 = arith.constant 0 : i32
    %c0_i32_2 = arith.constant 0 : i32
    return %c0_i32, %c0_i32_0, %c0_i32_1 : i32, i32, i32
  }
  func.func @transform_4(%arg0: i32) -> (i32, i32) {
    %c0_i32 = arith.constant 0 : i32
    %c0_i32_0 = arith.constant 0 : i32
    %c0_i32_1 = arith.constant 0 : i32
    return %c0_i32, %c0_i32_0 : i32, i32
  }
  func.func @transform_5(%arg0: i32) -> (i32, i32, i32) {
    %c0_i32 = arith.constant 0 : i32
    %c0_i32_0 = arith.constant 0 : i32
    %c0_i32_1 = arith.constant 0 : i32
    return %arg0, %c0_i32, %c0_i32_0 : i32, i32, i32
  }
}

</mosaic_0001>

<llo_original>
// kernel: tile.8
$region0: #{tile.8}
  #allocation0 [shape = 's32[1]{0}', space=sflag, size = 0x4, scoped, tag = 'scoped memory for tile.8']
  %s0 = inlined_call_operand.vmem [shape: f32[8], index: 0, kind: input, shape index: {}]
  %s1 = inlined_call_operand.vmem [shape: f32[2,8], index: 1, kind: output, shape index: {}]
  // Predicated region
  $region2: #{tile.8} parent=0 // pred_check
    _
  $region3: #{tile.8} parent=0 // pred_check_branch
    %3 = sbr.rel (0) target = $region5
  $region4: #{tile.8} parent=0 // pred_region
    _
  $region5: #{tile.8} parent=0 // pred_fallthru
    _
  %v4 = vld [vmem:[%s0] ss:$0 sm:$0xff]
  %5 = vst [vmem:[%s1] sm:$0x3] %v4

// kernel: tile.9
$region0: #{tile.9}
  %s0 = inlined_call_operand.vmem [shape: f32[2,8], index: 0, kind: input, shape index: {}]
  %s1 = inlined_call_operand.vmem [shape: f32[16], index: 1, kind: output, shape index: {}]
  $region1: #{tile.9} parent=0
    #allocation0 [shape = 'u8[4096]{0}', space=vmem, size = 0x1000, scoped, tag = 'scoped mem for output reshape']
    #allocation1 [shape = 'u8[4096]{0}', space=vmem, size = 0x1000, scoped, tag = 'scoped mem for input reshape']
    %s3 = sshll.u32 1, 2
    %s4 = ssub.s32 %s3, 1
    %v5 = vld [vmem:[%s0] sm:%s4]
    %6 = vst [vmem:[#allocation1] sm:%s4] %v5
    %v7 = vld [vmem:[#allocation1] sm:$0x1]
    %vm8 = vcmask 64512
    %9 = vst.msk [vmem:[#allocation0] sm:$0x1] %vm8, %v7
    %s10 = scalar_lea.vmem [#allocation1], 1
    %v11 = vld [vmem:[%s10] sm:$0x1]
    %12 = vrot.lane.b32.xlu0 %v11, 8
    %v13 = vpop.permute.xlu0 %12
    %vm14 = vcmask 130112
    %15 = vst.msk [vmem:[#allocation0] sm:$0x1] %vm14, %v13
    %s17 = sshll.u32 1, 1
    %s18 = ssub.s32 %s17, 1
    %v20 = vld [vmem:[#allocation0] sm:%s18]
    %s21 = sshll.u32 1, 1
    %s22 = ssub.s32 %s21, 1
    %23 = vst [vmem:[%s1] sm:%s22] %v20

// kernel: hybrid_embed_fused.1
$region0: #{hybrid_embed_fused.1}
  #allocation0 [shape = 'u32[]', space=smem, size = 0x4, offset = 0x4, fixed_abs, tag = 'smem constant byte address 0x4 - core index']
  #allocation1 [shape = 'u32[144,128]{1,0:T(1,128)}', space=vmem, size = 0x12000, scoped, tag = 'internal scratch']
  %s0 = inlined_call_operand.vmem [shape: f32[4,8,2,32], index: 0, kind: input, shape index: {}]
  %s1 = inlined_call_operand.vmem [shape: bf16[4,32,128], index: 1, kind: input, shape index: {}]
  %s2 = inlined_call_operand.vmem [shape: f32[1,128], index: 2, kind: input, shape index: {}]
  %s3 = inlined_call_operand.vmem [shape: bf16[2,128,128], index: 3, kind: input, shape index: {}]
  %s4 = inlined_call_operand.vmem [shape: f32[1,128], index: 4, kind: input, shape index: {}]
  %s5 = inlined_call_operand.hbm [shape: bf16[4,2,128], index: 5, kind: output, shape index: {}]
  %s6 = sld [smem:[#allocation0]]
  $region53: #{hybrid_embed_fused.1} parent=0
    _
  %s8 = ssub.s32 1, %s6
  %s9 = scalar_select 0, %s8, %s6
  $region1: #{hybrid_embed_fused.1} parent=0
    #allocation2 [shape = 'u8[1024]{0}', space=vmem, size = 0x400, scoped, tag = 'output window, operand 0']
    #allocation3 [shape = 's32[2]{0}', space=sflag, size = 0x8, scoped, tag = 'scoped memory for hybrid_embed_fused.1']
    %10 = vsyncpa [#allocation3], 0
    %s11 = scalar_lea.sflag [#allocation3], 1
    %12 = vsyncpa %s11, 0
    loop: start=0, step=1, limit=6
    $region2: #{hybrid_embed_fused.1} parent=1 // loop_pre_header
      _
    $region3: #{hybrid_embed_fused.1} parent=1 // loop_header
      %s14 = sphi 0, %s18
      %p15 = scmp.ge.s32.totalorder %s14, 6
      %s24 = sphi 0, %s26
      %s27 = sphi 0, %s24
      %s28 = sphi 0, %s27
      %s44 = sphi 0, %s28
      %s48 = sphi 0, %s48
      %s50 = sphi 0, %s48
      %s51 = sphi 0, %s50
      %s65 = sphi 0, %s51
      %s69 = sphi 0, %s69
      %s71 = sphi 0, %s69
      %s72 = sphi 0, %s71
      %s86 = sphi 0, %s72
      %s90 = sphi 0, %s90
      %s92 = sphi 0, %s90
      %s93 = sphi 0, %s92
      %s107 = sphi 0, %s93
      %s111 = sphi 0, %s111
      %s113 = sphi 0, %s111
      %s114 = sphi 0, %s113
      %s128 = sphi 0, %s114
      %s134 = sphi 0, %s136
      %s137 = sphi 0, %s134
      %s138 = sphi 0, %s137
      %s154 = sphi 0, %s138
    $region4: #{hybrid_embed_fused.1} parent=1 // loop_header_branch
      %17 = sbr.rel (%p15) target = $region8
    $region5: #{hybrid_embed_fused.1} parent=1 // loop_body
      %s19 = ssub.s32 %s14, 1
      %s20 = ssub.s32 %s14, 2
      %s21 = sadd.s32 %s14, 1
      %s22 = ssub.s32 %s14, %s21
      %p23 = scmp.eq.s32.totalorder %s22, 0
      %s25 = sadd.s32 %s24, 1
      %s26 = scalar_select %p23, %s24, %s25
      %p29 = pneg %p23
      %p30 = scmp.eq.s32.totalorder %s14, 3
      %p31 = por %p29, %p30
      %p32 = scmp.ne.s32.totalorder %s24, %s27
      %p33 = scmp.eq.s32.totalorder %s14, 0
      %p34 = por %p32, %p33
      %p35 = scmp.ne.s32.totalorder %s24, %s27
      %p36 = scmp.eq.s32.totalorder %s19, 3
      %p37 = por %p35, %p36
      %p38 = scmp.ne.s32.totalorder %s27, %s28
      %p39 = scmp.eq.s32.totalorder %s19, 0
      %p40 = por %p38, %p39
      %p41 = scmp.ne.s32.totalorder %s27, %s28
      %p42 = scmp.eq.s32.totalorder %s20, 3
      %p43 = por %p41, %p42
      %p45 = scmp.ne.s32.totalorder %s28, %s44
      %p46 = scmp.eq.s32.totalorder %s20, 0
      %p47 = por %p45, %p46
      %s49 = sadd.s32 %s48, 1
      %p52 = scmp.eq.s32.totalorder %s14, 3
      %p53 = scmp.ne.s32.totalorder %s48, %s50
      %p54 = scmp.eq.s32.totalorder %s14, 0
      %p55 = por %p53, %p54
      %p56 = scmp.ne.s32.totalorder %s48, %s50
      %p57 = scmp.eq.s32.totalorder %s19, 3
      %p58 = por %p56, %p57
      %p59 = scmp.ne.s32.totalorder %s50, %s51
      %p60 = scmp.eq.s32.totalorder %s19, 0
      %p61 = por %p59, %p60
      %p62 = scmp.ne.s32.totalorder %s50, %s51
      %p63 = scmp.eq.s32.totalorder %s20, 3
      %p64 = por %p62, %p63
      %p66 = scmp.ne.s32.totalorder %s51, %s65
      %p67 = scmp.eq.s32.totalorder %s20, 0
      %p68 = por %p66, %p67
      %s70 = sadd.s32 %s69, 1
      %p73 = scmp.eq.s32.totalorder %s14, 3
      %p74 = scmp.ne.s32.totalorder %s69, %s71
      %p75 = scmp.eq.s32.totalorder %s14, 0
      %p76 = por %p74, %p75
      %p77 = scmp.ne.s32.totalorder %s69, %s71
      %p78 = scmp.eq.s32.totalorder %s19, 3
      %p79 = por %p77, %p78
      %p80 = scmp.ne.s32.totalorder %s71, %s72
      %p81 = scmp.eq.s32.totalorder %s19, 0
      %p82 = por %p80, %p81
      %p83 = scmp.ne.s32.totalorder %s71, %s72
      %p84 = scmp.eq.s32.totalorder %s20, 3
      %p85 = por %p83, %p84
      %p87 = scmp.ne.s32.totalorder %s72, %s86
      %p88 = scmp.eq.s32.totalorder %s20, 0
      %p89 = por %p87, %p88
      %s91 = sadd.s32 %s90, 1
      %p94 = scmp.eq.s32.totalorder %s14, 3
      %p95 = scmp.ne.s32.totalorder %s90, %s92
      %p96 = scmp.eq.s32.totalorder %s14, 0
      %p97 = por %p95, %p96
      %p98 = scmp.ne.s32.totalorder %s90, %s92
      %p99 = scmp.eq.s32.totalorder %s19, 3
      %p100 = por %p98, %p99
      %p101 = scmp.ne.s32.totalorder %s92, %s93
      %p102 = scmp.eq.s32.totalorder %s19, 0
      %p103 = por %p101, %p102
      %p104 = scmp.ne.s32.totalorder %s92, %s93
      %p105 = scmp.eq.s32.totalorder %s20, 3
      %p106 = por %p104, %p105
      %p108 = scmp.ne.s32.totalorder %s93, %s107
      %p109 = scmp.eq.s32.totalorder %s20, 0
      %p110 = por %p108, %p109
      %s112 = sadd.s32 %s111, 1
      %p115 = scmp.eq.s32.totalorder %s14, 3
      %p116 = scmp.ne.s32.totalorder %s111, %s113
      %p117 = scmp.eq.s32.totalorder %s14, 0
      %p118 = por %p116, %p117
      %p119 = scmp.ne.s32.totalorder %s111, %s113
      %p120 = scmp.eq.s32.totalorder %s19, 3
      %p121 = por %p119, %p120
      %p122 = scmp.ne.s32.totalorder %s113, %s114
      %p123 = scmp.eq.s32.totalorder %s19, 0
      %p124 = por %p122, %p123
      %p125 = scmp.ne.s32.totalorder %s113, %s114
      %p126 = scmp.eq.s32.totalorder %s20, 3
      %p127 = por %p125, %p126
      %p129 = scmp.ne.s32.totalorder %s114, %s128
      %p130 = scmp.eq.s32.totalorder %s20, 0
      %p131 = por %p129, %p130
      %s132 = ssub.s32 %s14, %s21
      %p133 = scmp.eq.s32.totalorder %s132, 0
      %s135 = sadd.s32 %s134, 1
      %s136 = scalar_select %p133, %s134, %s135
      %p139 = pneg %p133
      %p140 = scmp.eq.s32.totalorder %s14, 3
      %p141 = por %p139, %p140
      %p142 = scmp.ne.s32.totalorder %s134, %s137
      %p143 = scmp.eq.s32.totalorder %s14, 0
      %p144 = por %p142, %p143
      %p145 = scmp.ne.s32.totalorder %s134, %s137
      %p146 = scmp.eq.s32.totalorder %s19, 3
      %p147 = por %p145, %p146
      %p148 = scmp.ne.s32.totalorder %s137, %s138
      %p149 = scmp.eq.s32.totalorder %s19, 0
      %p150 = por %p148, %p149
      %p151 = scmp.ne.s32.totalorder %s137, %s138
      %p152 = scmp.eq.s32.totalorder %s20, 3
      %p153 = por %p151, %p152
      %p155 = scmp.ne.s32.totalorder %s138, %s154
      %p156 = scmp.eq.s32.totalorder %s20, 0
      %p157 = por %p155, %p156
      %p158 = scmp.le.s32.totalorder 1, %s14
      %p159 = scmp.lt.s32.totalorder %s14, 5
      %p160 = pnand %p158, %p159
      %p161 = pneg %p160
      // Predicated region
      $region9: #{hybrid_embed_fused.1} parent=5 // pred_check
        _
      $region10: #{hybrid_embed_fused.1} parent=5 // pred_check_branch
        %163 = sbr.rel (%p160) target = $region12
      $region11: #{hybrid_embed_fused.1} parent=5 // pred_region
        %s164 = ssub.s32 %s14, 1
        // Predicated region
        $region13: #{hybrid_embed_fused.1} parent=11 // pred_check
          %p165 = pneg %p61
        $region14: #{hybrid_embed_fused.1} parent=11 // pred_check_branch
          %167 = sbr.rel (%p165) target = $region16
        $region15: #{hybrid_embed_fused.1} parent=11 // pred_region
          _
        $region16: #{hybrid_embed_fused.1} parent=11 // pred_fallthru
          _
        // Predicated region
        $region17: #{hybrid_embed_fused.1} parent=11 // pred_check
          %p168 = pneg %p82
        $region18: #{hybrid_embed_fused.1} parent=11 // pred_check_branch
          %170 = sbr.rel (%p168) target = $region20
        $region19: #{hybrid_embed_fused.1} parent=11 // pred_region
          _
        $region20: #{hybrid_embed_fused.1} parent=11 // pred_fallthru
          _
        // Predicated region
        $region21: #{hybrid_embed_fused.1} parent=11 // pred_check
          %p171 = pneg %p103
        $region22: #{hybrid_embed_fused.1} parent=11 // pred_check_branch
          %173 = sbr.rel (%p171) target = $region24
        $region23: #{hybrid_embed_fused.1} parent=11 // pred_region
          _
        $region24: #{hybrid_embed_fused.1} parent=11 // pred_fallthru
          _
        // Predicated region
        $region25: #{hybrid_embed_fused.1} parent=11 // pred_check
          %p174 = pneg %p124
        $region26: #{hybrid_embed_fused.1} parent=11 // pred_check_branch
          %176 = sbr.rel (%p174) target = $region28
        $region27: #{hybrid_embed_fused.1} parent=11 // pred_region
          _
        $region28: #{hybrid_embed_fused.1} parent=11 // pred_fallthru
          _
      $region12: #{hybrid_embed_fused.1} parent=5 // pred_fallthru
        _
      %p177 = scmp.lt.s32.totalorder %s14, 4
      // Predicated region
      $region29: #{hybrid_embed_fused.1} parent=5 // pred_check
        %p178 = pneg %p177
      $region30: #{hybrid_embed_fused.1} parent=5 // pred_check_branch
        %180 = sbr.rel (%p178) target = $region32
      $region31: #{hybrid_embed_fused.1} parent=5 // pred_region
        // Predicated region
        $region33: #{hybrid_embed_fused.1} parent=31 // pred_check
          %p181 = pneg %p34
        $region34: #{hybrid_embed_fused.1} parent=31 // pred_check_branch
          %183 = sbr.rel (%p181) target = $region36
        $region35: #{hybrid_embed_fused.1} parent=31 // pred_region
          %p184 = scmp.lt.s32.totalorder %s14, 3
          %s185 = scalar_select %p184, %s14, 3
          %s186 = smul.addr %s185, 8
          %s187 = smul.addr %s186, 2
          %s188 = scalar_lea.vmem %s0, %s187
        $region36: #{hybrid_embed_fused.1} parent=31 // pred_fallthru
          _
      $region32: #{hybrid_embed_fused.1} parent=5 // pred_fallthru
        _
      %p189 = scmp.le.s32.totalorder 1, %s14
      %p190 = scmp.lt.s32.totalorder %s14, 5
      %p191 = pnand %p189, %p190
      %p192 = pneg %p191
      // Predicated region
      $region37: #{hybrid_embed_fused.1} parent=5 // pred_check
        _
      $region38: #{hybrid_embed_fused.1} parent=5 // pred_check_branch
        %194 = sbr.rel (%p191) target = $region40
      $region39: #{hybrid_embed_fused.1} parent=5 // pred_region
        %s195 = ssub.s32 %s14, 1
        %p196 = scmp.lt.s32.totalorder %s19, 3
        %s197 = scalar_select %p196, %s19, 3
        %s198 = smul.addr %s197, 8
        %s199 = smul.addr %s198, 2
        %s200 = scalar_lea.vmem %s0, %s199
        %p201 = pneg %p40
        %p202 = pneg %p37
        %p203 = pneg %p61
        %p204 = pneg %p58
        %p205 = pneg %p82
        %p206 = pneg %p79
        %p207 = pneg %p103
        %p208 = pneg %p100
        %p209 = pneg %p124
        %p210 = pneg %p121
        %p211 = pneg %p150
        %p212 = pneg %p147
        %s213 = sand.u32 %s137, 1
        %s214 = scalar_lea.sflag [#allocation3], %s213
        %s215 = sand.u32 %s137, 1
        %s216 = scalar_lea.vmem [#allocation2], %s215
        %p217 = scmp.lt.s32.totalorder %s19, 3
        %s218 = scalar_select %p217, %s19, 3
        %s219 = smul.addr %s218, 8
        %s220 = smul.addr %s219, 2
        %s221 = scalar_lea.vmem %s0, %s220
        %v223 = vld [vmem:[%s2] sm:$0x1]
        %v224 = vld [vmem:[%s4] sm:$0x1]
        %v225 = vld [vmem:[%s221] sm:$0x3]
        %v226 = vpack.c.bf16 %v225, %v225
        %v227 = vld [vmem:[%s1] sm:$0xf]
        %v228 = vld [vmem:[%s1 + $0x4] sm:$0xf]
        %v229 = vld [vmem:[%s1 + $0x8] sm:$0xf]
        %v230 = vld [vmem:[%s1 + $0xc] sm:$0xf]
        %s231 = scalar_lea.vmem %s221, 2
        %v232 = vld [vmem:[%s231] sm:$0x3]
        %v233 = vpack.c.bf16 %v232, %v232
        %s234 = scalar_lea.vmem %s1, 16
        %v235 = vld [vmem:[%s234] sm:$0xf]
        %v236 = vld [vmem:[%s234 + $0x4] sm:$0xf]
        %v237 = vld [vmem:[%s234 + $0x8] sm:$0xf]
        %v238 = vld [vmem:[%s234 + $0xc] sm:$0xf]
        %v243 = vunpack.c.l.b16 %v235
        %v244 = vunpack.c.l.b16 %v236
        %v245 = vunpack.c.l.b16 %v237
        %v246 = vunpack.c.l.b16 %v238
        %v247 = vpack.c.b16 %v244, %v243
        %v248 = vpack.c.b16 %v246, %v245
        %vm251 = vcmask 261120
        %v253 = vsel %vm251, %v233, 0
        %255 = vmatprep.subr.bf16.mxu0 0
        %256 = vmatpush1.bf16.msra.mxu0 0
        %257 = vmatprep.subr.bf16.mxu0 0
        %258 = vmatpush1.bf16.msra.mxu0 0
        %259 = vmatprep.subr.bf16.mxu0 0
        %260 = vmatpush1.bf16.msra.mxu0 0
        %261 = vmatprep.subr.bf16.mxu0 0
        %262 = vmatpush1.bf16.msra.mxu0 0
        %263 = vmatprep.subr.bf16.mxu0 0
        %264 = vmatpush1.bf16.msra.mxu0 0
        %265 = vmatprep.subr.bf16.mxu0 0
        %266 = vmatpush1.bf16.msra.mxu0 0
        %267 = vmatprep.subr.bf16.mxu0 0
        %268 = vmatpush1.bf16.msra.mxu0 %v248
        %269 = vmatprep.subr.bf16.mxu0 0
        %270 = vmatpush1.bf16.msra.mxu0 %v247
        %271 = vmatprep.subr.bf16.mxu0 0
        %272 = vmatpush2.bf16.msra.mxu0 0
        %273 = vmatprep.subr.bf16.mxu0 0
        %274 = vmatpush2.bf16.msra.mxu0 0
        %275 = vmatprep.subr.bf16.mxu0 0
        %276 = vmatpush2.bf16.msra.mxu0 0
        %277 = vmatprep.subr.bf16.mxu0 0
        %278 = vmatpush2.bf16.msra.mxu0 0
        %279 = vmatprep.subr.bf16.mxu0 0
        %280 = vmatpush2.bf16.msra.mxu0 0
        %281 = vmatprep.subr.bf16.mxu0 0
        %282 = vmatpush2.bf16.msra.mxu0 0
        %283 = vmatprep.subr.bf16.mxu0 0
        %284 = vmatpush2.bf16.msra.mxu0 0
        %285 = vmatprep.subr.bf16.mxu0 0
        %286 = vmatpush2.bf16.msra.mxu0 0
        %287 = vmatprep.mubr.bf16.mxu0 0
        %288 = vmatmul.mubr.bf16.gmra.mxu0 %v253
        %v289 = vpop.f32.mrf.mxu0
        %v290 = vadd.f32 0.0, %v289
        %v291 = vpop.f32.mrf.mxu0
        %v292 = vpop.f32.mrf.mxu0
        %v293 = vpop.f32.mrf.mxu0
        %294 = vdwg.mxu0
        %v299 = vunpack.c.l.b16 %v227
        %v300 = vunpack.c.l.b16 %v228
        %v301 = vunpack.c.l.b16 %v229
        %v302 = vunpack.c.l.b16 %v230
        %v303 = vpack.c.b16 %v300, %v299
        %v304 = vpack.c.b16 %v302, %v301
        %v308 = vsel %vm251, %v226, 0
        %310 = vmatprep.subr.bf16.mxu0 0
        %311 = vmatpush1.bf16.msra.mxu0 0
        %312 = vmatprep.subr.bf16.mxu0 0
        %313 = vmatpush1.bf16.msra.mxu0 0
        %314 = vmatprep.subr.bf16.mxu0 0
        %315 = vmatpush1.bf16.msra.mxu0 0
        %316 = vmatprep.subr.bf16.mxu0 0
        %317 = vmatpush1.bf16.msra.mxu0 0
        %318 = vmatprep.subr.bf16.mxu0 0
        %319 = vmatpush1.bf16.msra.mxu0 0
        %320 = vmatprep.subr.bf16.mxu0 0
        %321 = vmatpush1.bf16.msra.mxu0 0
        %322 = vmatprep.subr.bf16.mxu0 0
        %323 = vmatpush1.bf16.msra.mxu0 %v304
        %324 = vmatprep.subr.bf16.mxu0 0
        %325 = vmatpush1.bf16.msra.mxu0 %v303
        %326 = vmatprep.subr.bf16.mxu0 0
        %327 = vmatpush2.bf16.msra.mxu0 0
        %328 = vmatprep.subr.bf16.mxu0 0
        %329 = vmatpush2.bf16.msra.mxu0 0
        %330 = vmatprep.subr.bf16.mxu0 0
        %331 = vmatpush2.bf16.msra.mxu0 0
        %332 = vmatprep.subr.bf16.mxu0 0
        %333 = vmatpush2.bf16.msra.mxu0 0
        %334 = vmatprep.subr.bf16.mxu0 0
        %335 = vmatpush2.bf16.msra.mxu0 0
        %336 = vmatprep.subr.bf16.mxu0 0
        %337 = vmatpush2.bf16.msra.mxu0 0
        %338 = vmatprep.subr.bf16.mxu0 0
        %339 = vmatpush2.bf16.msra.mxu0 0
        %340 = vmatprep.subr.bf16.mxu0 0
        %341 = vmatpush2.bf16.msra.mxu0 0
        %342 = vmatprep.mubr.bf16.mxu0 0
        %343 = vmatmul.mubr.bf16.gmra.mxu0 %v308
        %v344 = vpop.f32.mrf.mxu0
        %v345 = vadd.f32 %v290, %v344
        %v346 = vpop.f32.mrf.mxu0
        %v347 = vpop.f32.mrf.mxu0
        %v348 = vpop.f32.mrf.mxu0
        %349 = vdwg.mxu0
        %s350 = scalar_lea.vmem %s221, 4
        %v351 = vld [vmem:[%s350] sm:$0x3]
        %v352 = vpack.c.bf16 %v351, %v351
        %s353 = scalar_lea.vmem %s1, 32
        %v354 = vld [vmem:[%s353] sm:$0xf]
        %v355 = vld [vmem:[%s353 + $0x4] sm:$0xf]
        %v356 = vld [vmem:[%s353 + $0x8] sm:$0xf]
        %v357 = vld [vmem:[%s353 + $0xc] sm:$0xf]
        %v362 = vunpack.c.l.b16 %v354
        %v363 = vunpack.c.l.b16 %v355
        %v364 = vunpack.c.l.b16 %v356
        %v365 = vunpack.c.l.b16 %v357
        %v366 = vpack.c.b16 %v363, %v362
        %v367 = vpack.c.b16 %v365, %v364
        %v371 = vsel %vm251, %v352, 0
        %373 = vmatprep.subr.bf16.mxu0 0
        %374 = vmatpush1.bf16.msra.mxu0 0
        %375 = vmatprep.subr.bf16.mxu0 0
        %376 = vmatpush1.bf16.msra.mxu0 0
        %377 = vmatprep.subr.bf16.mxu0 0
        %378 = vmatpush1.bf16.msra.mxu0 0
        %379 = vmatprep.subr.bf16.mxu0 0
        %380 = vmatpush1.bf16.msra.mxu0 0
        %381 = vmatprep.subr.bf16.mxu0 0
        %382 = vmatpush1.bf16.msra.mxu0 0
        %383 = vmatprep.subr.bf16.mxu0 0
        %384 = vmatpush1.bf16.msra.mxu0 0
        %385 = vmatprep.subr.bf16.mxu0 0
        %386 = vmatpush1.bf16.msra.mxu0 %v367
        %387 = vmatprep.subr.bf16.mxu0 0
        %388 = vmatpush1.bf16.msra.mxu0 %v366
        %389 = vmatprep.subr.bf16.mxu0 0
        %390 = vmatpush2.bf16.msra.mxu0 0
        %391 = vmatprep.subr.bf16.mxu0 0
        %392 = vmatpush2.bf16.msra.mxu0 0
        %393 = vmatprep.subr.bf16.mxu0 0
        %394 = vmatpush2.bf16.msra.mxu0 0
        %395 = vmatprep.subr.bf16.mxu0 0
        %396 = vmatpush2.bf16.msra.mxu0 0
        %397 = vmatprep.subr.bf16.mxu0 0
        %398 = vmatpush2.bf16.msra.mxu0 0
        %399 = vmatprep.subr.bf16.mxu0 0
        %400 = vmatpush2.bf16.msra.mxu0 0
        %401 = vmatprep.subr.bf16.mxu0 0
        %402 = vmatpush2.bf16.msra.mxu0 0
        %403 = vmatprep.subr.bf16.mxu0 0
        %404 = vmatpush2.bf16.msra.mxu0 0
        %405 = vmatprep.mubr.bf16.mxu0 0
        %406 = vmatmul.mubr.bf16.gmra.mxu0 %v371
        %v407 = vpop.f32.mrf.mxu0
        %v408 = vadd.f32 0.0, %v407
        %v409 = vpop.f32.mrf.mxu0
        %v410 = vpop.f32.mrf.mxu0
        %v411 = vpop.f32.mrf.mxu0
        %412 = vdwg.mxu0
        %v413 = vadd.f32 %v345, %v408
        %s414 = scalar_lea.vmem %s221, 6
        %v415 = vld [vmem:[%s414] sm:$0x3]
        %v416 = vpack.c.bf16 %v415, %v415
        %s417 = scalar_lea.vmem %s1, 48
        %v418 = vld [vmem:[%s417] sm:$0xf]
        %v419 = vld [vmem:[%s417 + $0x4] sm:$0xf]
        %v420 = vld [vmem:[%s417 + $0x8] sm:$0xf]
        %v421 = vld [vmem:[%s417 + $0xc] sm:$0xf]
        %v426 = vunpack.c.l.b16 %v418
        %v427 = vunpack.c.l.b16 %v419
        %v428 = vunpack.c.l.b16 %v420
        %v429 = vunpack.c.l.b16 %v421
        %v430 = vpack.c.b16 %v427, %v426
        %v431 = vpack.c.b16 %v429, %v428
        %v435 = vsel %vm251, %v416, 0
        %437 = vmatprep.subr.bf16.mxu0 0
        %438 = vmatpush1.bf16.msra.mxu0 0
        %439 = vmatprep.subr.bf16.mxu0 0
        %440 = vmatpush1.bf16.msra.mxu0 0
        %441 = vmatprep.subr.bf16.mxu0 0
        %442 = vmatpush1.bf16.msra.mxu0 0
        %443 = vmatprep.subr.bf16.mxu0 0
        %444 = vmatpush1.bf16.msra.mxu0 0
        %445 = vmatprep.subr.bf16.mxu0 0
        %446 = vmatpush1.bf16.msra.mxu0 0
        %447 = vmatprep.subr.bf16.mxu0 0
        %448 = vmatpush1.bf16.msra.mxu0 0
        %449 = vmatprep.subr.bf16.mxu0 0
        %450 = vmatpush1.bf16.msra.mxu0 %v431
        %451 = vmatprep.subr.bf16.mxu0 0
        %452 = vmatpush1.bf16.msra.mxu0 %v430
        %453 = vmatprep.subr.bf16.mxu0 0
        %454 = vmatpush2.bf16.msra.mxu0 0
        %455 = vmatprep.subr.bf16.mxu0 0
        %456 = vmatpush2.bf16.msra.mxu0 0
        %457 = vmatprep.subr.bf16.mxu0 0
        %458 = vmatpush2.bf16.msra.mxu0 0
        %459 = vmatprep.subr.bf16.mxu0 0
        %460 = vmatpush2.bf16.msra.mxu0 0
        %461 = vmatprep.subr.bf16.mxu0 0
        %462 = vmatpush2.bf16.msra.mxu0 0
        %463 = vmatprep.subr.bf16.mxu0 0
        %464 = vmatpush2.bf16.msra.mxu0 0
        %465 = vmatprep.subr.bf16.mxu0 0
        %466 = vmatpush2.bf16.msra.mxu0 0
        %467 = vmatprep.subr.bf16.mxu0 0
        %468 = vmatpush2.bf16.msra.mxu0 0
        %469 = vmatprep.mubr.bf16.mxu0 0
        %470 = vmatmul.mubr.bf16.gmra.mxu0 %v435
        %v471 = vpop.f32.mrf.mxu0
        %v472 = vadd.f32 0.0, %v471
        %v473 = vpop.f32.mrf.mxu0
        %v474 = vpop.f32.mrf.mxu0
        %v475 = vpop.f32.mrf.mxu0
        %476 = vdwg.mxu0
        %v477 = vadd.f32 %v413, %v472
        %v479 = vlaneseq
        %v480 = vshrl.u32 %v479, 7
        %v481 = vsub.s32 0, %v480
        %v482 = vrot.slane %v223, %v481
        %v484 = vadd.f32 %v477, %v482
        %v485 = vmax.f32 %v484, 0.0
        %v486 = vpack.c.bf16 %v485, %v485
        %v487 = vld [vmem:[%s3] sm:$0xf]
        %v488 = vld [vmem:[%s3 + $0x4] sm:$0xf]
        %v489 = vld [vmem:[%s3 + $0x8] sm:$0xf]
        %v490 = vld [vmem:[%s3 + $0xc] sm:$0xf]
        %v491 = vld [vmem:[%s3 + $0x10] sm:$0xf]
        %v492 = vld [vmem:[%s3 + $0x14] sm:$0xf]
        %v493 = vld [vmem:[%s3 + $0x18] sm:$0xf]
        %v494 = vld [vmem:[%s3 + $0x1c] sm:$0xf]
        %v495 = vld [vmem:[%s3 + $0x20] sm:$0xf]
        %v496 = vld [vmem:[%s3 + $0x24] sm:$0xf]
        %v497 = vld [vmem:[%s3 + $0x28] sm:$0xf]
        %v498 = vld [vmem:[%s3 + $0x2c] sm:$0xf]
        %v499 = vld [vmem:[%s3 + $0x30] sm:$0xf]
        %v500 = vld [vmem:[%s3 + $0x34] sm:$0xf]
        %v501 = vld [vmem:[%s3 + $0x38] sm:$0xf]
        %v502 = vld [vmem:[%s3 + $0x3c] sm:$0xf]
        %s503 = scalar_lea.vmem %s221, 8
        %v504 = vld [vmem:[%s503] sm:$0x3]
        %v505 = vpack.c.bf16 %v504, %v504
        %s506 = scalar_lea.vmem %s221, 10
        %v507 = vld [vmem:[%s506] sm:$0x3]
        %v508 = vpack.c.bf16 %v507, %v507
        %v510 = vsel %vm251, %v508, 0
        %512 = vmatprep.subr.bf16.mxu0 0
        %513 = vmatpush1.bf16.msra.mxu0 0
        %514 = vmatprep.subr.bf16.mxu0 0
        %515 = vmatpush1.bf16.msra.mxu0 0
        %516 = vmatprep.subr.bf16.mxu0 0
        %517 = vmatpush1.bf16.msra.mxu0 0
        %518 = vmatprep.subr.bf16.mxu0 0
        %519 = vmatpush1.bf16.msra.mxu0 0
        %520 = vmatprep.subr.bf16.mxu0 0
        %521 = vmatpush1.bf16.msra.mxu0 0
        %522 = vmatprep.subr.bf16.mxu0 0
        %523 = vmatpush1.bf16.msra.mxu0 0
        %524 = vmatprep.subr.bf16.mxu0 0
        %525 = vmatpush1.bf16.msra.mxu0 %v248
        %526 = vmatprep.subr.bf16.mxu0 0
        %527 = vmatpush1.bf16.msra.mxu0 %v247
        %528 = vmatprep.subr.bf16.mxu0 0
        %529 = vmatpush2.bf16.msra.mxu0 0
        %530 = vmatprep.subr.bf16.mxu0 0
        %531 = vmatpush2.bf16.msra.mxu0 0
        %532 = vmatprep.subr.bf16.mxu0 0
        %533 = vmatpush2.bf16.msra.mxu0 0
        %534 = vmatprep.subr.bf16.mxu0 0
        %535 = vmatpush2.bf16.msra.mxu0 0
        %536 = vmatprep.subr.bf16.mxu0 0
        %537 = vmatpush2.bf16.msra.mxu0 0
        %538 = vmatprep.subr.bf16.mxu0 0
        %539 = vmatpush2.bf16.msra.mxu0 0
        %540 = vmatprep.subr.bf16.mxu0 0
        %541 = vmatpush2.bf16.msra.mxu0 0
        %542 = vmatprep.subr.bf16.mxu0 0
        %543 = vmatpush2.bf16.msra.mxu0 0
        %544 = vmatprep.mubr.bf16.mxu0 0
        %545 = vmatmul.mubr.bf16.gmra.mxu0 %v510
        %v546 = vpop.f32.mrf.mxu0
        %v547 = vadd.f32 0.0, %v546
        %v548 = vpop.f32.mrf.mxu0
        %v549 = vpop.f32.mrf.mxu0
        %v550 = vpop.f32.mrf.mxu0
        %551 = vdwg.mxu0
        %v553 = vsel %vm251, %v505, 0
        %555 = vmatprep.subr.bf16.mxu0 0
        %556 = vmatpush1.bf16.msra.mxu0 0
        %557 = vmatprep.subr.bf16.mxu0 0
        %558 = vmatpush1.bf16.msra.mxu0 0
        %559 = vmatprep.subr.bf16.mxu0 0
        %560 = vmatpush1.bf16.msra.mxu0 0
        %561 = vmatprep.subr.bf16.mxu0 0
        %562 = vmatpush1.bf16.msra.mxu0 0
        %563 = vmatprep.subr.bf16.mxu0 0
        %564 = vmatpush1.bf16.msra.mxu0 0
        %565 = vmatprep.subr.bf16.mxu0 0
        %566 = vmatpush1.bf16.msra.mxu0 0
        %567 = vmatprep.subr.bf16.mxu0 0
        %568 = vmatpush1.bf16.msra.mxu0 %v304
        %569 = vmatprep.subr.bf16.mxu0 0
        %570 = vmatpush1.bf16.msra.mxu0 %v303
        %571 = vmatprep.subr.bf16.mxu0 0
        %572 = vmatpush2.bf16.msra.mxu0 0
        %573 = vmatprep.subr.bf16.mxu0 0
        %574 = vmatpush2.bf16.msra.mxu0 0
        %575 = vmatprep.subr.bf16.mxu0 0
        %576 = vmatpush2.bf16.msra.mxu0 0
        %577 = vmatprep.subr.bf16.mxu0 0
        %578 = vmatpush2.bf16.msra.mxu0 0
        %579 = vmatprep.subr.bf16.mxu0 0
        %580 = vmatpush2.bf16.msra.mxu0 0
        %581 = vmatprep.subr.bf16.mxu0 0
        %582 = vmatpush2.bf16.msra.mxu0 0
        %583 = vmatprep.subr.bf16.mxu0 0
        %584 = vmatpush2.bf16.msra.mxu0 0
        %585 = vmatprep.subr.bf16.mxu0 0
        %586 = vmatpush2.bf16.msra.mxu0 0
        %587 = vmatprep.mubr.bf16.mxu0 0
        %588 = vmatmul.mubr.bf16.gmra.mxu0 %v553
        %v589 = vpop.f32.mrf.mxu0
        %v590 = vadd.f32 %v547, %v589
        %v591 = vpop.f32.mrf.mxu0
        %v592 = vpop.f32.mrf.mxu0
        %v593 = vpop.f32.mrf.mxu0
        %594 = vdwg.mxu0
        %s595 = scalar_lea.vmem %s221, 12
        %v596 = vld [vmem:[%s595] sm:$0x3]
        %v597 = vpack.c.bf16 %v596, %v596
        %v599 = vsel %vm251, %v597, 0
        %601 = vmatprep.subr.bf16.mxu0 0
        %602 = vmatpush1.bf16.msra.mxu0 0
        %603 = vmatprep.subr.bf16.mxu0 0
        %604 = vmatpush1.bf16.msra.mxu0 0
        %605 = vmatprep.subr.bf16.mxu0 0
        %606 = vmatpush1.bf16.msra.mxu0 0
        %607 = vmatprep.subr.bf16.mxu0 0
        %608 = vmatpush1.bf16.msra.mxu0 0
        %609 = vmatprep.subr.bf16.mxu0 0
        %610 = vmatpush1.bf16.msra.mxu0 0
        %611 = vmatprep.subr.bf16.mxu0 0
        %612 = vmatpush1.bf16.msra.mxu0 0
        %613 = vmatprep.subr.bf16.mxu0 0
        %614 = vmatpush1.bf16.msra.mxu0 %v367
        %615 = vmatprep.subr.bf16.mxu0 0
        %616 = vmatpush1.bf16.msra.mxu0 %v366
        %617 = vmatprep.subr.bf16.mxu0 0
        %618 = vmatpush2.bf16.msra.mxu0 0
        %619 = vmatprep.subr.bf16.mxu0 0
        %620 = vmatpush2.bf16.msra.mxu0 0
        %621 = vmatprep.subr.bf16.mxu0 0
        %622 = vmatpush2.bf16.msra.mxu0 0
        %623 = vmatprep.subr.bf16.mxu0 0
        %624 = vmatpush2.bf16.msra.mxu0 0
        %625 = vmatprep.subr.bf16.mxu0 0
        %626 = vmatpush2.bf16.msra.mxu0 0
        %627 = vmatprep.subr.bf16.mxu0 0
        %628 = vmatpush2.bf16.msra.mxu0 0
        %629 = vmatprep.subr.bf16.mxu0 0
        %630 = vmatpush2.bf16.msra.mxu0 0
        %631 = vmatprep.subr.bf16.mxu0 0
        %632 = vmatpush2.bf16.msra.mxu0 0
        %633 = vmatprep.mubr.bf16.mxu0 0
        %634 = vmatmul.mubr.bf16.gmra.mxu0 %v599
        %v635 = vpop.f32.mrf.mxu0
        %v636 = vadd.f32 0.0, %v635
        %v637 = vpop.f32.mrf.mxu0
        %v638 = vpop.f32.mrf.mxu0
        %v639 = vpop.f32.mrf.mxu0
        %640 = vdwg.mxu0
        %v641 = vadd.f32 %v590, %v636
        %s642 = scalar_lea.vmem %s221, 14
        %v643 = vld [vmem:[%s642] sm:$0x3]
        %v644 = vpack.c.bf16 %v643, %v643
        %v646 = vsel %vm251, %v644, 0
        %648 = vmatprep.subr.bf16.mxu0 0
        %649 = vmatpush1.bf16.msra.mxu0 0
        %650 = vmatprep.subr.bf16.mxu0 0
        %651 = vmatpush1.bf16.msra.mxu0 0
        %652 = vmatprep.subr.bf16.mxu0 0
        %653 = vmatpush1.bf16.msra.mxu0 0
        %654 = vmatprep.subr.bf16.mxu0 0
        %655 = vmatpush1.bf16.msra.mxu0 0
        %656 = vmatprep.subr.bf16.mxu0 0
        %657 = vmatpush1.bf16.msra.mxu0 0
        %658 = vmatprep.subr.bf16.mxu0 0
        %659 = vmatpush1.bf16.msra.mxu0 0
        %660 = vmatprep.subr.bf16.mxu0 0
        %661 = vmatpush1.bf16.msra.mxu0 %v431
        %662 = vmatprep.subr.bf16.mxu0 0
        %663 = vmatpush1.bf16.msra.mxu0 %v430
        %664 = vmatprep.subr.bf16.mxu0 0
        %665 = vmatpush2.bf16.msra.mxu0 0
        %666 = vmatprep.subr.bf16.mxu0 0
        %667 = vmatpush2.bf16.msra.mxu0 0
        %668 = vmatprep.subr.bf16.mxu0 0
        %669 = vmatpush2.bf16.msra.mxu0 0
        %670 = vmatprep.subr.bf16.mxu0 0
        %671 = vmatpush2.bf16.msra.mxu0 0
        %672 = vmatprep.subr.bf16.mxu0 0
        %673 = vmatpush2.bf16.msra.mxu0 0
        %674 = vmatprep.subr.bf16.mxu0 0
        %675 = vmatpush2.bf16.msra.mxu0 0
        %676 = vmatprep.subr.bf16.mxu0 0
        %677 = vmatpush2.bf16.msra.mxu0 0
        %678 = vmatprep.subr.bf16.mxu0 0
        %679 = vmatpush2.bf16.msra.mxu0 0
        %680 = vmatprep.mubr.bf16.mxu0 0
        %681 = vmatmul.mubr.bf16.gmra.mxu0 %v646
        %v682 = vpop.f32.mrf.mxu0
        %v683 = vadd.f32 0.0, %v682
        %v684 = vpop.f32.mrf.mxu0
        %v685 = vpop.f32.mrf.mxu0
        %v686 = vpop.f32.mrf.mxu0
        %687 = vdwg.mxu0
        %v688 = vadd.f32 %v641, %v683
        %v689 = vadd.f32 %v688, %v482
        %v690 = vmax.f32 %v689, 0.0
        %v691 = vpack.c.bf16 %v690, %v690
        %s692 = scalar_lea.vmem %s3, 64
        %v693 = vld [vmem:[%s692] sm:$0xf]
        %v694 = vld [vmem:[%s692 + $0x4] sm:$0xf]
        %v695 = vld [vmem:[%s692 + $0x8] sm:$0xf]
        %v696 = vld [vmem:[%s692 + $0xc] sm:$0xf]
        %v697 = vld [vmem:[%s692 + $0x10] sm:$0xf]
        %v698 = vld [vmem:[%s692 + $0x14] sm:$0xf]
        %v699 = vld [vmem:[%s692 + $0x18] sm:$0xf]
        %v700 = vld [vmem:[%s692 + $0x1c] sm:$0xf]
        %v701 = vld [vmem:[%s692 + $0x20] sm:$0xf]
        %v702 = vld [vmem:[%s692 + $0x24] sm:$0xf]
        %v703 = vld [vmem:[%s692 + $0x28] sm:$0xf]
        %v704 = vld [vmem:[%s692 + $0x2c] sm:$0xf]
        %v705 = vld [vmem:[%s692 + $0x30] sm:$0xf]
        %v706 = vld [vmem:[%s692 + $0x34] sm:$0xf]
        %v707 = vld [vmem:[%s692 + $0x38] sm:$0xf]
        %v708 = vld [vmem:[%s692 + $0x3c] sm:$0xf]
        %v725 = vunpack.c.l.b16 %v693
        %v726 = vunpack.c.l.b16 %v694
        %v727 = vunpack.c.l.b16 %v695
        %v728 = vunpack.c.l.b16 %v696
        %v729 = vunpack.c.l.b16 %v697
        %v730 = vunpack.c.l.b16 %v698
        %v731 = vunpack.c.l.b16 %v699
        %v732 = vunpack.c.l.b16 %v700
        %v733 = vunpack.c.l.b16 %v701
        %v734 = vunpack.c.l.b16 %v702
        %v735 = vunpack.c.l.b16 %v703
        %v736 = vunpack.c.l.b16 %v704
        %v737 = vunpack.c.l.b16 %v705
        %v738 = vunpack.c.l.b16 %v706
        %v739 = vunpack.c.l.b16 %v707
        %v740 = vunpack.c.l.b16 %v708
        %v741 = vpack.c.b16 %v726, %v725
        %v742 = vpack.c.b16 %v728, %v727
        %v743 = vpack.c.b16 %v730, %v729
        %v744 = vpack.c.b16 %v732, %v731
        %v745 = vpack.c.b16 %v734, %v733
        %v746 = vpack.c.b16 %v736, %v735
        %v747 = vpack.c.b16 %v738, %v737
        %v748 = vpack.c.b16 %v740, %v739
        %757 = vmatprep.subr.bf16.mxu0 0
        %758 = vmatpush1.bf16.msra.mxu0 %v748
        %759 = vmatprep.subr.bf16.mxu0 0
        %760 = vmatpush1.bf16.msra.mxu0 %v747
        %761 = vmatprep.subr.bf16.mxu0 0
        %762 = vmatpush1.bf16.msra.mxu0 %v746
        %763 = vmatprep.subr.bf16.mxu0 0
        %764 = vmatpush1.bf16.msra.mxu0 %v745
        %765 = vmatprep.subr.bf16.mxu0 0
        %766 = vmatpush1.bf16.msra.mxu0 %v744
        %767 = vmatprep.subr.bf16.mxu0 0
        %768 = vmatpush1.bf16.msra.mxu0 %v743
        %769 = vmatprep.subr.bf16.mxu0 0
        %770 = vmatpush1.bf16.msra.mxu0 %v742
        %771 = vmatprep.subr.bf16.mxu0 0
        %772 = vmatpush1.bf16.msra.mxu0 %v741
        %773 = vmatprep.subr.bf16.mxu0 0
        %774 = vmatpush2.bf16.msra.mxu0 0
        %775 = vmatprep.subr.bf16.mxu0 0
        %776 = vmatpush2.bf16.msra.mxu0 0
        %777 = vmatprep.subr.bf16.mxu0 0
        %778 = vmatpush2.bf16.msra.mxu0 0
        %779 = vmatprep.subr.bf16.mxu0 0
        %780 = vmatpush2.bf16.msra.mxu0 0
        %781 = vmatprep.subr.bf16.mxu0 0
        %782 = vmatpush2.bf16.msra.mxu0 0
        %783 = vmatprep.subr.bf16.mxu0 0
        %784 = vmatpush2.bf16.msra.mxu0 0
        %785 = vmatprep.subr.bf16.mxu0 0
        %786 = vmatpush2.bf16.msra.mxu0 0
        %787 = vmatprep.subr.bf16.mxu0 0
        %788 = vmatpush2.bf16.msra.mxu0 0
        %789 = vmatprep.mubr.bf16.mxu0 0
        %790 = vmatmul.mubr.bf16.gmra.mxu0 %v691
        %v791 = vpop.f32.mrf.mxu0
        %v792 = vadd.f32 0.0, %v791
        %v793 = vpop.f32.mrf.mxu0
        %v794 = vpop.f32.mrf.mxu0
        %v795 = vpop.f32.mrf.mxu0
        %796 = vdwg.mxu0
        %v813 = vunpack.c.l.b16 %v487
        %v814 = vunpack.c.l.b16 %v488
        %v815 = vunpack.c.l.b16 %v489
        %v816 = vunpack.c.l.b16 %v490
        %v817 = vunpack.c.l.b16 %v491
        %v818 = vunpack.c.l.b16 %v492
        %v819 = vunpack.c.l.b16 %v493
        %v820 = vunpack.c.l.b16 %v494
        %v821 = vunpack.c.l.b16 %v495
        %v822 = vunpack.c.l.b16 %v496
        %v823 = vunpack.c.l.b16 %v497
        %v824 = vunpack.c.l.b16 %v498
        %v825 = vunpack.c.l.b16 %v499
        %v826 = vunpack.c.l.b16 %v500
        %v827 = vunpack.c.l.b16 %v501
        %v828 = vunpack.c.l.b16 %v502
        %v829 = vpack.c.b16 %v814, %v813
        %v830 = vpack.c.b16 %v816, %v815
        %v831 = vpack.c.b16 %v818, %v817
        %v832 = vpack.c.b16 %v820, %v819
        %v833 = vpack.c.b16 %v822, %v821
        %v834 = vpack.c.b16 %v824, %v823
        %v835 = vpack.c.b16 %v826, %v825
        %v836 = vpack.c.b16 %v828, %v827
        %845 = vmatprep.subr.bf16.mxu0 0
        %846 = vmatpush1.bf16.msra.mxu0 %v836
        %847 = vmatprep.subr.bf16.mxu0 0
        %848 = vmatpush1.bf16.msra.mxu0 %v835
        %849 = vmatprep.subr.bf16.mxu0 0
        %850 = vmatpush1.bf16.msra.mxu0 %v834
        %851 = vmatprep.subr.bf16.mxu0 0
        %852 = vmatpush1.bf16.msra.mxu0 %v833
        %853 = vmatprep.subr.bf16.mxu0 0
        %854 = vmatpush1.bf16.msra.mxu0 %v832
        %855 = vmatprep.subr.bf16.mxu0 0
        %856 = vmatpush1.bf16.msra.mxu0 %v831
        %857 = vmatprep.subr.bf16.mxu0 0
        %858 = vmatpush1.bf16.msra.mxu0 %v830
        %859 = vmatprep.subr.bf16.mxu0 0
        %860 = vmatpush1.bf16.msra.mxu0 %v829
        %861 = vmatprep.subr.bf16.mxu0 0
        %862 = vmatpush2.bf16.msra.mxu0 0
        %863 = vmatprep.subr.bf16.mxu0 0
        %864 = vmatpush2.bf16.msra.mxu0 0
        %865 = vmatprep.subr.bf16.mxu0 0
        %866 = vmatpush2.bf16.msra.mxu0 0
        %867 = vmatprep.subr.bf16.mxu0 0
        %868 = vmatpush2.bf16.msra.mxu0 0
        %869 = vmatprep.subr.bf16.mxu0 0
        %870 = vmatpush2.bf16.msra.mxu0 0
        %871 = vmatprep.subr.bf16.mxu0 0
        %872 = vmatpush2.bf16.msra.mxu0 0
        %873 = vmatprep.subr.bf16.mxu0 0
        %874 = vmatpush2.bf16.msra.mxu0 0
        %875 = vmatprep.subr.bf16.mxu0 0
        %876 = vmatpush2.bf16.msra.mxu0 0
        %877 = vmatprep.mubr.bf16.mxu0 0
        %878 = vmatmul.mubr.bf16.gmra.mxu0 %v486
        %v879 = vpop.f32.mrf.mxu0
        %v880 = vadd.f32 %v792, %v879
        %v881 = vpop.f32.mrf.mxu0
        %v882 = vpop.f32.mrf.mxu0
        %v883 = vpop.f32.mrf.mxu0
        %884 = vdwg.mxu0
        %v886 = vlaneseq
        %v887 = vshrl.u32 %v886, 7
        %v888 = vsub.s32 0, %v887
        %v889 = vrot.slane %v224, %v888
        %v891 = vadd.f32 %v880, %v889
        %v892 = vpack.c.bf16 %v891, %v891
        %893 = vst [vmem:[%s216] sm:$0x1] %v892
        %s894 = sand.u32 %s137, 1
        %s895 = scalar_lea.sflag [#allocation3], %s894
        %s896 = sand.u32 %s137, 1
        %s897 = scalar_lea.vmem [#allocation2], %s896
        // Predicated region
        $region41: #{hybrid_embed_fused.1} parent=39 // pred_check
          %p898 = pneg %p147
        $region42: #{hybrid_embed_fused.1} parent=39 // pred_check_branch
          %900 = sbr.rel (%p898) target = $region44
        $region43: #{hybrid_embed_fused.1} parent=39 // pred_region
          %s902 = ssub.s32 16, 16
          %903 = vsyncadd %s895, %s902
          %s904 = smul.addr %s19, 16
          %s905 = scalar_lea.hbm %s5, %s904
          %s907 = sshll.u32 %s897, 4
          %s908 = int_to_ptr.vmem [resolvable:$true] %s907
          %910 = dma.vmem_to_hbm [thread:$0]  %s908, 16, %s905, %s895
        $region44: #{hybrid_embed_fused.1} parent=39 // pred_fallthru
          _
      $region40: #{hybrid_embed_fused.1} parent=5 // pred_fallthru
        _
      %p911 = scmp.le.s32.totalorder 2, %s14
      // Predicated region
      $region45: #{hybrid_embed_fused.1} parent=5 // pred_check
        %p912 = pneg %p911
      $region46: #{hybrid_embed_fused.1} parent=5 // pred_check_branch
        %914 = sbr.rel (%p912) target = $region48
      $region47: #{hybrid_embed_fused.1} parent=5 // pred_region
        %s915 = ssub.s32 %s14, 2
        // Predicated region
        $region49: #{hybrid_embed_fused.1} parent=47 // pred_check
          %p916 = pneg %p153
        $region50: #{hybrid_embed_fused.1} parent=47 // pred_check_branch
          %918 = sbr.rel (%p916) target = $region52
        $region51: #{hybrid_embed_fused.1} parent=47 // pred_region
          %s919 = sand.u32 %s138, 1
          %s920 = scalar_lea.sflag [#allocation3], %s919
          %s921 = sand.u32 %s138, 1
          %s922 = scalar_lea.vmem [#allocation2], %s921
          %923 = dma.done %s920, 16
        $region52: #{hybrid_embed_fused.1} parent=47 // pred_fallthru
          _
      $region48: #{hybrid_embed_fused.1} parent=5 // pred_fallthru
        _
    $region6: #{hybrid_embed_fused.1} parent=1 // loop_footer
      %s18 = sadd.s32 1, %s14
    $region7: #{hybrid_embed_fused.1} parent=1 // loop_footer_branch
      %13 = sbr.rel target = $region3
    $region8: #{hybrid_embed_fused.1} parent=1 // loop_exit
      _
    %924 = vsyncpa [#allocation3], 1
    %s925 = scalar_lea.sflag [#allocation3], 1
    %926 = vsyncpa %s925, 1

</llo_original>
